<compile_context>
chip_gen: v7x
topology: tpu7x:2x2x1
jax: 0.10.0
libtpu: 0.0.40
codegen_flags: <defaults>
</compile_context>

<pallas_src>
import jax
import jax.numpy as jnp
from jax import lax
from jax.experimental import pallas as pl
from jax.experimental.pallas import tpu as pltpu


def _round_up(x, m):
    return ((x + m - 1) // m) * m


def _gelu_exact(x):
    # nn.GELU() default is the exact (erf-based) GELU.
    return 0.5 * x * (1.0 + lax.erf(x * 0.7071067811865476))


# ---------------------------------------------------------------------------
# Kernels
# ---------------------------------------------------------------------------
def _adapter_kernel_fused(x_ref, w1_ref, b1_ref, w2_ref, b2_ref, out_ref):
    # Whole W2 resident in VMEM; single grid axis over row tiles.
    h = jnp.dot(x_ref[...], w1_ref[...], preferred_element_type=jnp.float32)
    h = _gelu_exact(h + b1_ref[...].astype(jnp.float32))
    y = jnp.dot(h.astype(w2_ref.dtype), w2_ref[...],
                preferred_element_type=jnp.float32)
    out_ref[...] = (y + b2_ref[...].astype(jnp.float32)).astype(out_ref.dtype)


def _adapter_kernel_coltiled(x_ref, w1_ref, b1_ref, w2_ref, b2_ref, out_ref,
                             h_ref):
    # Grid axis j walks output-column tiles of W2, so the full H x H weight is
    # never VMEM-resident (required for large H on v7x, 64 MiB/TC).
    # h = gelu(x @ W1 + b1) is computed once per row tile (j == 0) and cached
    # in a VMEM scratch; it is NOT recomputed per column tile.
    @pl.when(pl.program_id(1) == 0)
    def _():
        h = jnp.dot(x_ref[...], w1_ref[...],
                    preferred_element_type=jnp.float32)
        h_ref[...] = _gelu_exact(
            h + b1_ref[...].astype(jnp.float32)).astype(h_ref.dtype)

    y = jnp.dot(h_ref[...], w2_ref[...], preferred_element_type=jnp.float32)
    out_ref[...] = (y + b2_ref[...].astype(jnp.float32)).astype(out_ref.dtype)


# ---------------------------------------------------------------------------
# Parameter preparation (call ONCE at init -- keeps padding off the hot path)
# ---------------------------------------------------------------------------
def prepare_adapter_params(w1, b1, w2, b2, compute_dtype=None):
    """Pad the hidden dim to a multiple of 128 (lane-dense) and optionally cast.

    Weights are stored [in, out] (transpose of PyTorch nn.Linear).
    compute_dtype=jnp.bfloat16 is a (usually acceptable) numerics tradeoff that
    hits MXU peak on v6e/v7x and halves W2's VMEM footprint.
    Zero padding is a mathematical no-op: gelu(0 + 0) = 0 and padded W2
    rows/cols only feed output columns that are sliced off.
    """
    _, H = w1.shape
    H_pad = _round_up(H, 128)
    if compute_dtype is not None:
        w1, b1, w2, b2 = (a.astype(compute_dtype) for a in (w1, b1, w2, b2))
    ph = H_pad - H
    if ph:
        w1 = jnp.pad(w1, ((0, 0), (0, ph)))
        b1 = jnp.pad(b1, ((0, ph),))
        w2 = jnp.pad(w2, ((0, ph), (0, ph)))
        b2 = jnp.pad(b2, ((0, ph),))
    return {
        "w1": w1, "b1": b1.reshape(1, H_pad),
        "w2": w2, "b2": b2.reshape(1, H_pad),
        "out_dim": H,  # python int; keep static if you jit the wrapper
    }


# ---------------------------------------------------------------------------
# VMEM budgeting and tile selection
# ---------------------------------------------------------------------------
def _vmem_capacity_bytes():
    # Generation-aware cap: 128 MiB/TC on v5e/v6e, 64 MiB/TC on v7x.
    try:
        return int(pltpu.get_tpu_info().vmem_capacity_bytes)
    except Exception:
        return 64 << 20  # conservative fallback, valid on every generation


def _working_set_bytes(tm, tn, D_in, H_pad, x_bytes, w_bytes, out_bytes,
                       col_tiled):
    """VMEM footprint estimate, including Mosaic-materialized intermediates."""
    D_vm = _round_up(D_in, 128)            # lane-padded VMEM layout of x / W1
    s = 2 * tm * D_vm * x_bytes            # x tiles (double buffered)
    s += D_vm * H_pad * w_bytes            # W1 (single buffered)
    s += 2 * 8 * H_pad * w_bytes           # b1 / b2 (sublane padded)
    if col_tiled:
        s += 2 * H_pad * tn * w_bytes      # W2 column tiles (double buffered)
        s += 2 * tm * tn * out_bytes       # out tiles (double buffered)
        s += tm * H_pad * w_bytes          # h scratch (persistent)
        s += tm * H_pad * 8                # f32 h + cast at j == 0
        s += tm * tn * 4                   # f32 y before final cast
    else:
        s += H_pad * H_pad * w_bytes       # W2 resident (single buffered)
        s += 2 * tm * H_pad * out_bytes    # out tiles (double buffered)
        s += tm * H_pad * (8 + w_bytes)    # f32 h, cast h, f32 y
    return s


def _select_tiling(N, D_in, H_pad, x_bytes, w_bytes, out_bytes, vmem_cap,
                   tm_hint):
    budget = int(vmem_cap * 0.75)
    row_cap = _round_up(max(N, 1), 8)

    def clamp_tm(t):
        return max(8, min(_round_up(t, 8), row_cap))

    def ws(tm, tn, ct):
        return _working_set_bytes(tm, tn, D_in, H_pad, x_bytes, w_bytes,
                                  out_bytes, ct)

    tn_cands = [t for t in (1024, 512, 256, 128) if t < H_pad]

    # 1) Prefer the fused path (W2 is read from HBM exactly once); shrink the
    #    row tile down to 128 before giving it up.
    t = clamp_tm(tm_hint)
    while True:
        if ws(t, H_pad, False) <= budget:
            return t, H_pad, False
        if t <= 128:
            break
        t = clamp_tm(t // 2)

    # 2) Column-tile W2 (large row tile preferred: fewer W2 re-reads per pass).
    t = clamp_tm(tm_hint)
    while True:
        for tn in tn_cands:
            if ws(t, tn, True) <= budget:
                return t, tn, True
        if t <= 8:
            break
        t = clamp_tm(t // 2)

    # 3) Last resorts.
    t = clamp_tm(128)
    while True:
        if ws(t, H_pad, False) <= budget:
            return t, H_pad, False
        if t <= 8:
            break
        t = clamp_tm(t // 2)
    return 8, (tn_cands[-1] if tn_cands else H_pad), bool(tn_cands)


# ---------------------------------------------------------------------------
# Forward wrapper
# ---------------------------------------------------------------------------
def modality_adapter(audio_features, params, *, tm=512, tn=None,
                     out_dtype=None):
    """audio_features: [B, T, D_in]; params from prepare_adapter_params.

    Returns [B, T, llm_hidden_dim] = layer2(gelu(layer1(audio_features))).
    """
    B, T, D_in = audio_features.shape
    w1, b1, w2, b2 = params["w1"], params["b1"], params["w2"], params["b2"]
    H = int(params["out_dim"])
    H_pad = w2.shape[1]
    assert w1.shape == (D_in, H_pad)

    N = B * T
    # No jnp.pad of activations: the x block uses the full feature dim as its
    # last block dim and the ragged last row block is handled by masking.
    x2d = audio_features.reshape(N, D_in)
    out_dtype = out_dtype or audio_features.dtype

    x_bytes = jnp.dtype(audio_features.dtype).itemsize
    w_bytes = jnp.dtype(w1.dtype).itemsize
    out_bytes = jnp.dtype(out_dtype).itemsize

    vmem_cap = _vmem_capacity_bytes()
    row_cap = _round_up(max(N, 1), 8)

    if tn is not None:
        # Caller forced a column-tile width (testing / manual tuning).
        tn_eff = min(H_pad, _round_up(max(tn, 128), 128))
        col_tiled = tn_eff < H_pad
        tm_eff = max(8, min(_round_up(tm, 8), row_cap))
    else:
        tm_eff, tn_eff, col_tiled = _select_tiling(
            N, D_in, H_pad, x_bytes, w_bytes, out_bytes, vmem_cap, tm)

    ws = _working_set_bytes(tm_eff, tn_eff, D_in, H_pad, x_bytes, w_bytes,
                            out_bytes, col_tiled)
    vmem_limit = int(min(int(vmem_cap * 0.9),
                         max(32 << 20, ws * 4 // 3 + (4 << 20))))

    resident = dict(pipeline_mode=pl.Buffered(1))  # constant-index operands

    if not col_tiled:
        grid_spec = pltpu.PrefetchScalarGridSpec(
            num_scalar_prefetch=0,
            grid=(pl.cdiv(N, tm_eff),),
            in_specs=[
                pl.BlockSpec((tm_eff, D_in), lambda i: (i, 0)),            # x
                pl.BlockSpec((D_in, H_pad), lambda i: (0, 0), **resident),  # W1
                pl.BlockSpec((1, H_pad), lambda i: (0, 0), **resident),     # b1
                pl.BlockSpec((H_pad, H_pad), lambda i: (0, 0), **resident), # W2
                pl.BlockSpec((1, H_pad), lambda i: (0, 0), **resident),     # b2
            ],
            out_specs=pl.BlockSpec((tm_eff, H_pad), lambda i: (i, 0)),
        )
        kernel = _adapter_kernel_fused
        dims = ("parallel",)
    else:
        grid_spec = pltpu.PrefetchScalarGridSpec(
            num_scalar_prefetch=0,
            grid=(pl.cdiv(N, tm_eff), pl.cdiv(H_pad, tn_eff)),
            in_specs=[
                pl.BlockSpec((tm_eff, D_in), lambda i, j: (i, 0)),          # x
                pl.BlockSpec((D_in, H_pad), lambda i, j: (0, 0), **resident),  # W1
                pl.BlockSpec((1, H_pad), lambda i, j: (0, 0), **resident),     # b1
                pl.BlockSpec((H_pad, tn_eff), lambda i, j: (0, j)),            # W2 cols
                pl.BlockSpec((1, tn_eff), lambda i, j: (0, j)),                # b2 cols
            ],
            out_specs=pl.BlockSpec((tm_eff, tn_eff), lambda i, j: (i, j)),
            scratch_shapes=[pltpu.VMEM((tm_eff, H_pad), w2.dtype)],  # h cache
        )
        kernel = _adapter_kernel_coltiled
        # The h-cache makes the column axis a carried dependence -> arbitrary.
        # TODO(synk): for tiny N on v7x (2 TCs), a variant that recomputes h
        # per column tile could mark both axes "parallel" for megacore.
        dims = ("parallel", "arbitrary")

    out = pl.pallas_call(
        kernel,
        out_shape=jax.ShapeDtypeStruct((N, H_pad), out_dtype),
        grid_spec=grid_spec,
        compiler_params=pltpu.CompilerParams(
            dimension_semantics=dims,
            vmem_limit_bytes=vmem_limit),
    )(x2d, w1, b1, w2, b2)

    if H_pad != H:
        out = out[:, :H]
    return out.reshape(B, T, H)


# ---------------------------------------------------------------------------
# Init mimicking nn.Linear's uniform(-1/sqrt(fan_in), +1/sqrt(fan_in))
# ---------------------------------------------------------------------------
def init_params(key, audio_feature_dim, llm_hidden_dim, dtype=jnp.float32):
    k1, k2, k3, k4 = jax.random.split(key, 4)
    lim1 = 1.0 / (audio_feature_dim ** 0.5)
    lim2 = 1.0 / (llm_hidden_dim ** 0.5)
    # Stored as [in, out] (transpose of PyTorch layout).
    w1 = jax.random.uniform(k1, (audio_feature_dim, llm_hidden_dim),
                            dtype, -lim1, lim1)
    b1 = jax.random.uniform(k2, (llm_hidden_dim,), dtype, -lim1, lim1)
    w2 = jax.random.uniform(k3, (llm_hidden_dim, llm_hidden_dim),
                            dtype, -lim2, lim2)
    b2 = jax.random.uniform(k4, (llm_hidden_dim,), dtype, -lim2, lim2)
    return w1, b1, w2, b2


if __name__ == "__main__":
    # --- Test 1: small default config (fused, weight-resident path) --------
    key = jax.random.PRNGKey(0)
    kx, kp = jax.random.split(key)
    B, T = 2, 8
    audio_feature_dim, llm_hidden_dim = 32, 32
    audio_features = jax.random.normal(
        kx, (B, T, audio_feature_dim), dtype=jnp.float32)
    w1, b1, w2, b2 = init_params(kp, audio_feature_dim, llm_hidden_dim)
    params = prepare_adapter_params(w1, b1, w2, b2)  # pad once, off hot path

    out = jax.block_until_ready(modality_adapter(audio_features, params))
    ref = _gelu_exact(audio_features @ w1 + b1) @ w2 + b2
    assert out.shape == (B, T, llm_hidden_dim)
    assert jnp.allclose(out, ref, atol=1e-4, rtol=1e-4)

    # --- Test 2: force the column-tiled (large-H / v7x) path ---------------
    kx2, kp2 = jax.random.split(jax.random.PRNGKey(1))
    B2, T2 = 2, 20          # N = 40 -> ragged last row tile with tm=16
    d2, h2 = 96, 192        # H_pad = 256, tn = 128 -> 2 column tiles
    x2 = jax.random.normal(kx2, (B2, T2, d2), dtype=jnp.float32)
    w1b, b1b, w2b, b2b = init_params(kp2, d2, h2)
    params2 = prepare_adapter_params(w1b, b1b, w2b, b2b)

    out2 = jax.block_until_ready(
        modality_adapter(x2, params2, tm=16, tn=128))
    ref2 = _gelu_exact(x2 @ w1b + b1b) @ w2b + b2b
    assert out2.shape == (B2, T2, h2)
    assert jnp.allclose(out2, ref2, atol=5e-4, rtol=5e-4)

    print("KERNEL_OK")
</pallas_src>

<mosaic_0001>
module attributes {stable_mosaic.version = 11 : i64} {
  func.func @_adapter_kernel_fused(%arg0: i32, %arg1: memref<16x32xf32, #tpu.memory_space<vmem>>, %arg2: memref<32x128xf32, #tpu.memory_space<vmem>>, %arg3: memref<1x128xf32, #tpu.memory_space<vmem>>, %arg4: memref<128x128xf32, #tpu.memory_space<vmem>>, %arg5: memref<1x128xf32, #tpu.memory_space<vmem>>, %arg6: memref<16x128xf32, #tpu.memory_space<vmem>>) attributes {dimension_semantics = [#tpu.dimension_semantics<parallel>], iteration_bounds = array<i64: 1>, scalar_prefetch = 0 : i64, scratch_operands = 0 : i64, tpu.core_type = #tpu.core_type<tc>, window_params = [{transform_indices = @transform_0, window_bounds = array<i64: 16, 32>}, {pipeline_mode = #tpu.pipeline_mode<synchronous>, transform_indices = @transform_1, window_bounds = array<i64: 32, 128>}, {pipeline_mode = #tpu.pipeline_mode<synchronous>, transform_indices = @transform_2, window_bounds = array<i64: 1, 128>}, {pipeline_mode = #tpu.pipeline_mode<synchronous>, transform_indices = @transform_3, window_bounds = array<i64: 128, 128>}, {pipeline_mode = #tpu.pipeline_mode<synchronous>, transform_indices = @transform_4, window_bounds = array<i64: 1, 128>}, {transform_indices = @transform_5, window_bounds = array<i64: 16, 128>}]} {
    %c0 = arith.constant 0 : index
    %c0_0 = arith.constant 0 : index
    %0 = vector.load %arg1[%c0, %c0_0] : memref<16x32xf32, #tpu.memory_space<vmem>>, vector<16x32xf32>
    %c0_1 = arith.constant 0 : index
    %c0_2 = arith.constant 0 : index
    %1 = vector.load %arg2[%c0_1, %c0_2] : memref<32x128xf32, #tpu.memory_space<vmem>>, vector<32x128xf32>
    %cst = arith.constant dense<0.000000e+00> : vector<16x128xf32>
    %2 = tpu.matmul %0, %1, %cst {dimension_numbers = #tpu.dot_dimension_numbers<[1], [0], [0], [1], [0, 0, 1, 1], [], []>} : vector<16x32xf32>, vector<32x128xf32>, vector<16x128xf32> -> vector<16x128xf32>
    %c0_3 = arith.constant 0 : index
    %c0_4 = arith.constant 0 : index
    %3 = vector.load %arg3[%c0_3, %c0_4] : memref<1x128xf32, #tpu.memory_space<vmem>>, vector<1x128xf32>
    %4 = vector.broadcast %3 : vector<1x128xf32> to vector<16x128xf32>
    %5 = arith.addf %2, %4 : vector<16x128xf32>
    %cst_5 = arith.constant 5.000000e-01 : f32
    %6 = vector.broadcast %cst_5 : f32 to vector<16x128xf32>
    %7 = arith.mulf %6, %5 : vector<16x128xf32>
    %cst_6 = arith.constant 0.707106769 : f32
    %8 = vector.broadcast %cst_6 : f32 to vector<16x128xf32>
    %9 = arith.mulf %5, %8 : vector<16x128xf32>
    %10 = math.erf %9 : vector<16x128xf32>
    %cst_7 = arith.constant 1.000000e+00 : f32
    %11 = vector.broadcast %cst_7 : f32 to vector<16x128xf32>
    %12 = arith.addf %11, %10 : vector<16x128xf32>
    %13 = arith.mulf %7, %12 : vector<16x128xf32>
    %c0_8 = arith.constant 0 : index
    %c0_9 = arith.constant 0 : index
    %14 = vector.load %arg4[%c0_8, %c0_9] : memref<128x128xf32, #tpu.memory_space<vmem>>, vector<128x128xf32>
    %cst_10 = arith.constant dense<0.000000e+00> : vector<16x128xf32>
    %15 = tpu.matmul %13, %14, %cst_10 {dimension_numbers = #tpu.dot_dimension_numbers<[1], [0], [0], [1], [0, 0, 1, 1], [], []>} : vector<16x128xf32>, vector<128x128xf32>, vector<16x128xf32> -> vector<16x128xf32>
    %c0_11 = arith.constant 0 : index
    %c0_12 = arith.constant 0 : index
    %16 = vector.load %arg5[%c0_11, %c0_12] : memref<1x128xf32, #tpu.memory_space<vmem>>, vector<1x128xf32>
    %17 = vector.broadcast %16 : vector<1x128xf32> to vector<16x128xf32>
    %18 = arith.addf %15, %17 : vector<16x128xf32>
    %c0_13 = arith.constant 0 : index
    %c0_14 = arith.constant 0 : index
    %19 = vector.load %arg6[%c0_13, %c0_14] : memref<16x128xf32, #tpu.memory_space<vmem>>, vector<16x128xf32>
    tpu.vector_store %arg6[%c0_13, %c0_14], %18 {strides = array<i32>} : memref<16x128xf32, #tpu.memory_space<vmem>>, vector<16x128xf32>,
    return
  }
  func.func @transform_0(%arg0: i32) -> (i32, i32) {
    %c0_i32 = arith.constant 0 : i32
    %c0_i32_0 = arith.constant 0 : i32
    return %arg0, %c0_i32 : i32, i32
  }
  func.func @transform_1(%arg0: i32) -> (i32, i32) {
    %c0_i32 = arith.constant 0 : i32
    %c0_i32_0 = arith.constant 0 : i32
    %c0_i32_1 = arith.constant 0 : i32
    return %c0_i32, %c0_i32_0 : i32, i32
  }
  func.func @transform_2(%arg0: i32) -> (i32, i32) {
    %c0_i32 = arith.constant 0 : i32
    %c0_i32_0 = arith.constant 0 : i32
    %c0_i32_1 = arith.constant 0 : i32
    return %c0_i32, %c0_i32_0 : i32, i32
  }
  func.func @transform_3(%arg0: i32) -> (i32, i32) {
    %c0_i32 = arith.constant 0 : i32
    %c0_i32_0 = arith.constant 0 : i32
    %c0_i32_1 = arith.constant 0 : i32
    return %c0_i32, %c0_i32_0 : i32, i32
  }
  func.func @transform_4(%arg0: i32) -> (i32, i32) {
    %c0_i32 = arith.constant 0 : i32
    %c0_i32_0 = arith.constant 0 : i32
    %c0_i32_1 = arith.constant 0 : i32
    return %c0_i32, %c0_i32_0 : i32, i32
  }
  func.func @transform_5(%arg0: i32) -> (i32, i32) {
    %c0_i32 = arith.constant 0 : i32
    %c0_i32_0 = arith.constant 0 : i32
    return %arg0, %c0_i32 : i32, i32
  }
}

</mosaic_0001>

<llo_original>
// kernel: tpu_custom_call.1
$region0: #{tpu_custom_call.1}
  #allocation0 [shape = 'u32[]', space=smem, size = 0x4, offset = 0x4, fixed_abs, tag = 'smem constant byte address 0x4 - core index']
  #allocation1 [shape = 'u32[144,128]{1,0:T(1,128)}', space=vmem, size = 0x12000, scoped, tag = 'internal scratch']
  %s0 = inlined_call_operand.hbm [shape: f32[16,32], index: 0, kind: input, shape index: {}]
  %s1 = inlined_call_operand.hbm [shape: f32[32,128], index: 1, kind: input, shape index: {}]
  %s2 = inlined_call_operand.vmem [shape: f32[1,128], index: 2, kind: input, shape index: {}]
  %s3 = inlined_call_operand.hbm [shape: f32[128,128], index: 3, kind: input, shape index: {}]
  %s4 = inlined_call_operand.vmem [shape: f32[1,128], index: 4, kind: input, shape index: {}]
  %s5 = inlined_call_operand.hbm [shape: f32[16,128], index: 5, kind: output, shape index: {}]
  %s6 = sld [smem:[#allocation0]]
  $region42: #{tpu_custom_call.1} parent=0
    _
  %s8 = ssub.s32 1, %s6
  %s9 = scalar_select 0, %s8, %s6
  $region1: #{tpu_custom_call.1} parent=0
    #allocation2 [shape = 'u8[8192]{0}', space=vmem, size = 0x2000, scoped, tag = 'input window, operand 0, single buffered']
    #allocation3 [shape = 's32[1]{0}', space=sflag, size = 0x4, scoped, tag = 'scoped memory for tpu_custom_call.1']
    #allocation4 [shape = 's32[1]{0}', space=sflag, size = 0x4, scoped, tag = 'scoped memory for tpu_custom_call.1']
    #allocation5 [shape = 'u8[16384]{0}', space=vmem, size = 0x4000, scoped, tag = 'input window, operand 1, single buffered']
    #allocation6 [shape = 's32[1]{0}', space=sflag, size = 0x4, scoped, tag = 'scoped memory for tpu_custom_call.1']
    #allocation7 [shape = 'u8[65536]{0}', space=vmem, size = 0x10000, scoped, tag = 'input window, operand 3, single buffered']
    #allocation8 [shape = 'u8[8192]{0}', space=vmem, size = 0x2000, scoped, tag = 'output window, operand 0, single buffered']
    %10 = vsyncpa [#allocation3], 0
    %11 = vsyncpa [#allocation6], 0
    %12 = vsyncpa [#allocation4], 0
    // Predicated region
    $region2: #{tpu_custom_call.1} parent=1 // pred_check
      _
    $region3: #{tpu_custom_call.1} parent=1 // pred_check_branch
      %14 = sbr.rel (0) target = $region5
    $region4: #{tpu_custom_call.1} parent=1 // pred_region
      %s16 = ssub.s32 256, 256
      %17 = vsyncadd [#allocation3], %s16
      %s18 = sshll.u32 [#allocation2], 4
      %s19 = int_to_ptr.vmem [resolvable:$true] %s18
      %24 = dma.hbm_to_vmem [thread:$0]  %s0, 256, %s19, [#allocation3], 128, 128, 8
    $region5: #{tpu_custom_call.1} parent=1 // pred_fallthru
      _
    // Predicated region
    $region6: #{tpu_custom_call.1} parent=1 // pred_check
      _
    $region7: #{tpu_custom_call.1} parent=1 // pred_check_branch
      %26 = sbr.rel (0) target = $region9
    $region8: #{tpu_custom_call.1} parent=1 // pred_region
      %s28 = ssub.s32 512, 512
      %29 = vsyncadd [#allocation6], %s28
      %s30 = sshll.u32 [#allocation5], 4
      %s31 = int_to_ptr.vmem [resolvable:$true] %s30
      %36 = dma.hbm_to_vmem [thread:$0]  %s1, 512, %s31, [#allocation6], 128, 128, 8
    $region9: #{tpu_custom_call.1} parent=1 // pred_fallthru
      _
    // Predicated region
    $region10: #{tpu_custom_call.1} parent=1 // pred_check
      _
    $region11: #{tpu_custom_call.1} parent=1 // pred_check_branch
      %38 = sbr.rel (0) target = $region13
    $region12: #{tpu_custom_call.1} parent=1 // pred_region
      _
    $region13: #{tpu_custom_call.1} parent=1 // pred_fallthru
      _
    // Predicated region
    $region14: #{tpu_custom_call.1} parent=1 // pred_check
      _
    $region15: #{tpu_custom_call.1} parent=1 // pred_check_branch
      %40 = sbr.rel (0) target = $region17
    $region16: #{tpu_custom_call.1} parent=1 // pred_region
      %s42 = ssub.s32 2048, 2048
      %43 = vsyncadd [#allocation6], %s42
      %s44 = sshll.u32 [#allocation7], 4
      %s45 = int_to_ptr.vmem [resolvable:$true] %s44
      %50 = dma.hbm_to_vmem [thread:$0]  %s3, 2048, %s45, [#allocation6], 128, 128, 8
    $region17: #{tpu_custom_call.1} parent=1 // pred_fallthru
      _
    // Predicated region
    $region18: #{tpu_custom_call.1} parent=1 // pred_check
      _
    $region19: #{tpu_custom_call.1} parent=1 // pred_check_branch
      %52 = sbr.rel (0) target = $region21
    $region20: #{tpu_custom_call.1} parent=1 // pred_region
      _
    $region21: #{tpu_custom_call.1} parent=1 // pred_fallthru
      _
    // Predicated region
    $region22: #{tpu_custom_call.1} parent=1 // pred_check
      _
    $region23: #{tpu_custom_call.1} parent=1 // pred_check_branch
      %54 = sbr.rel (0) target = $region25
    $region24: #{tpu_custom_call.1} parent=1 // pred_region
      %55 = dma.done [#allocation3], 256
    $region25: #{tpu_custom_call.1} parent=1 // pred_fallthru
      _
    // Predicated region
    $region26: #{tpu_custom_call.1} parent=1 // pred_check
      _
    $region27: #{tpu_custom_call.1} parent=1 // pred_check_branch
      %57 = sbr.rel (0) target = $region29
    $region28: #{tpu_custom_call.1} parent=1 // pred_region
      %58 = dma.done [#allocation6], 512
    $region29: #{tpu_custom_call.1} parent=1 // pred_fallthru
      _
    // Predicated region
    $region30: #{tpu_custom_call.1} parent=1 // pred_check
      _
    $region31: #{tpu_custom_call.1} parent=1 // pred_check_branch
      %60 = sbr.rel (0) target = $region33
    $region32: #{tpu_custom_call.1} parent=1 // pred_region
      %61 = dma.done [#allocation6], 2048
    $region33: #{tpu_custom_call.1} parent=1 // pred_fallthru
      _
    %v62 = vld [vmem:[#allocation2] sm:$0xff]
    %v63 = vld [vmem:[#allocation2 + $0x8] sm:$0xff]
    %v64 = vld [vmem:[#allocation5] sm:$0xff]
    %v65 = vld [vmem:[#allocation5 + $0x8] sm:$0xff]
    %v66 = vld [vmem:[#allocation5 + $0x10] sm:$0xff]
    %v67 = vld [vmem:[#allocation5 + $0x18] sm:$0xff]
    %v68 = vld [vmem:[%s2] sm:$0x1]
    %v70 = vlaneseq
    %v71 = vshrl.u32 %v70, 7
    %v72 = vsub.s32 0, %v71
    %v73 = vrot.slane %v68, %v72
    %vm75 = vcmask 261120
    %v77 = vsel %vm75, %v62, 0
    %v80 = vsel %vm75, %v63, 0
    %82 = vmatprep.subr.mxu0 0.0
    %83 = vmatpush1.msra.mxu0 %v64
    %84 = vmatprep.subr.mxu0 0.0
    %85 = vmatpush1.msra.mxu0 %v65
    %86 = vmatprep.subr.mxu0 0.0
    %87 = vmatpush1.msra.mxu0 %v66
    %88 = vmatprep.subr.mxu0 0.0
    %89 = vmatpush1.msra.mxu0 %v67
    %90 = vmatprep.subr.mxu0 0.0
    %91 = vmatpush1.msra.mxu0 0.0
    %92 = vmatprep.subr.mxu0 0.0
    %93 = vmatpush1.msra.mxu0 0.0
    %94 = vmatprep.subr.mxu0 0.0
    %95 = vmatpush1.msra.mxu0 0.0
    %96 = vmatprep.subr.mxu0 0.0
    %97 = vmatpush1.msra.mxu0 0.0
    %98 = vmatprep.subr.mxu0 0.0
    %99 = vmatpush1.msra.mxu0 0.0
    %100 = vmatprep.subr.mxu0 0.0
    %101 = vmatpush1.msra.mxu0 0.0
    %102 = vmatprep.subr.mxu0 0.0
    %103 = vmatpush1.msra.mxu0 0.0
    %104 = vmatprep.subr.mxu0 0.0
    %105 = vmatpush1.msra.mxu0 0.0
    %106 = vmatprep.subr.mxu0 0.0
    %107 = vmatpush1.msra.mxu0 0.0
    %108 = vmatprep.subr.mxu0 0.0
    %109 = vmatpush1.msra.mxu0 0.0
    %110 = vmatprep.subr.mxu0 0.0
    %111 = vmatpush1.msra.mxu0 0.0
    %112 = vmatprep.subr.mxu0 0.0
    %113 = vmatpush1.msra.mxu0 0.0
    %114 = vmatprep.subr.mxu0 0.0
    %115 = vmatpush1.msra.mxu0 0.0
    %116 = vmatprep.subr.mxu0 0.0
    %117 = vmatpush1.msra.mxu0 0.0
    %118 = vmatprep.subr.mxu0 0.0
    %119 = vmatpush1.msra.mxu0 0.0
    %120 = vmatprep.subr.mxu0 0.0
    %121 = vmatpush1.msra.mxu0 0.0
    %122 = vmatprep.subr.mxu0 0.0
    %123 = vmatpush1.msra.mxu0 0.0
    %124 = vmatprep.subr.mxu0 0.0
    %125 = vmatpush1.msra.mxu0 0.0
    %126 = vmatprep.subr.mxu0 0.0
    %127 = vmatpush1.msra.mxu0 0.0
    %128 = vmatprep.subr.mxu0 0.0
    %129 = vmatpush1.msra.mxu0 0.0
    %130 = vmatprep.subr.mxu0 0.0
    %131 = vmatpush1.msra.mxu0 0.0
    %132 = vmatprep.subr.mxu0 0.0
    %133 = vmatpush1.msra.mxu0 0.0
    %134 = vmatprep.subr.mxu0 0.0
    %135 = vmatpush1.msra.mxu0 0.0
    %136 = vmatprep.subr.mxu0 0.0
    %137 = vmatpush1.msra.mxu0 0.0
    %138 = vmatprep.subr.mxu0 0.0
    %139 = vmatpush1.msra.mxu0 0.0
    %140 = vmatprep.subr.mxu0 0.0
    %141 = vmatpush1.msra.mxu0 0.0
    %142 = vmatprep.subr.mxu0 0.0
    %143 = vmatpush1.msra.mxu0 0.0
    %144 = vmatprep.subr.mxu0 0.0
    %145 = vmatpush1.msra.mxu0 0.0
    %146 = vmatprep.mubr.f32.mxu0 0.0
    %147 = vmatmul.mubr.f32.gmra.mrb[0].mxu0 %v77
    %v148 = vpop.f32.mrb[0].mxu0
    %v149 = vadd.f32 %v73, %v148
    %v150 = vpop.f32.mrb[0].mxu0
    %151 = vmatprep.mubr.f32.mxu0 0.0
    %152 = vmatmul.mubr.f32.gmra.mrb[0].mxu0 %v80
    %v153 = vpop.f32.mrb[0].mxu0
    %v154 = vadd.f32 %v73, %v153
    %v155 = vpop.f32.mrb[0].mxu0
    %156 = vdwg.mxu0
    %v157 = vmul.f32 %v149, 0.5
    %v158 = vmul.f32 %v154, 0.5
    %v159 = vmul.f32 %v149, 0.70710677
    %v160 = vmul.f32 %v154, 0.70710677
    %v161 = verf.f32.pop %v159
    %v162 = verf.f32.pop %v160
    %v163 = vadd.f32 %v161, 1.0
    %v164 = vadd.f32 %v162, 1.0
    %v165 = vmul.f32 %v157, %v163
    %v166 = vmul.f32 %v158, %v164
    %v167 = vld [vmem:[#allocation7] sm:$0xff]
    %v168 = vld [vmem:[#allocation7 + $0x8] sm:$0xff]
    %v169 = vld [vmem:[#allocation7 + $0x10] sm:$0xff]
    %v170 = vld [vmem:[#allocation7 + $0x18] sm:$0xff]
    %v171 = vld [vmem:[#allocation7 + $0x20] sm:$0xff]
    %v172 = vld [vmem:[#allocation7 + $0x28] sm:$0xff]
    %v173 = vld [vmem:[#allocation7 + $0x30] sm:$0xff]
    %v174 = vld [vmem:[#allocation7 + $0x38] sm:$0xff]
    %v175 = vld [vmem:[#allocation7 + $0x40] sm:$0xff]
    %v176 = vld [vmem:[#allocation7 + $0x48] sm:$0xff]
    %v177 = vld [vmem:[#allocation7 + $0x50] sm:$0xff]
    %v178 = vld [vmem:[#allocation7 + $0x58] sm:$0xff]
    %v179 = vld [vmem:[#allocation7 + $0x60] sm:$0xff]
    %v180 = vld [vmem:[#allocation7 + $0x68] sm:$0xff]
    %v181 = vld [vmem:[#allocation7 + $0x70] sm:$0xff]
    %v182 = vld [vmem:[#allocation7 + $0x78] sm:$0xff]
    %v183 = vld [vmem:[%s4] sm:$0x1]
    %v185 = vlaneseq
    %v186 = vshrl.u32 %v185, 7
    %v187 = vsub.s32 0, %v186
    %v188 = vrot.slane %v183, %v187
    %190 = vmatprep.subr.mxu0 0.0
    %191 = vmatpush1.msra.mxu0 %v167
    %192 = vmatprep.subr.mxu0 0.0
    %193 = vmatpush1.msra.mxu0 %v168
    %194 = vmatprep.subr.mxu0 0.0
    %195 = vmatpush1.msra.mxu0 %v169
    %196 = vmatprep.subr.mxu0 0.0
    %197 = vmatpush1.msra.mxu0 %v170
    %198 = vmatprep.subr.mxu0 0.0
    %199 = vmatpush1.msra.mxu0 %v171
    %200 = vmatprep.subr.mxu0 0.0
    %201 = vmatpush1.msra.mxu0 %v172
    %202 = vmatprep.subr.mxu0 0.0
    %203 = vmatpush1.msra.mxu0 %v173
    %204 = vmatprep.subr.mxu0 0.0
    %205 = vmatpush1.msra.mxu0 %v174
    %206 = vmatprep.subr.mxu0 0.0
    %207 = vmatpush1.msra.mxu0 %v175
    %208 = vmatprep.subr.mxu0 0.0
    %209 = vmatpush1.msra.mxu0 %v176
    %210 = vmatprep.subr.mxu0 0.0
    %211 = vmatpush1.msra.mxu0 %v177
    %212 = vmatprep.subr.mxu0 0.0
    %213 = vmatpush1.msra.mxu0 %v178
    %214 = vmatprep.subr.mxu0 0.0
    %215 = vmatpush1.msra.mxu0 %v179
    %216 = vmatprep.subr.mxu0 0.0
    %217 = vmatpush1.msra.mxu0 %v180
    %218 = vmatprep.subr.mxu0 0.0
    %219 = vmatpush1.msra.mxu0 %v181
    %220 = vmatprep.subr.mxu0 0.0
    %221 = vmatpush1.msra.mxu0 %v182
    %222 = vmatprep.subr.mxu0 0.0
    %223 = vmatpush1.msra.mxu0 0.0
    %224 = vmatprep.subr.mxu0 0.0
    %225 = vmatpush1.msra.mxu0 0.0
    %226 = vmatprep.subr.mxu0 0.0
    %227 = vmatpush1.msra.mxu0 0.0
    %228 = vmatprep.subr.mxu0 0.0
    %229 = vmatpush1.msra.mxu0 0.0
    %230 = vmatprep.subr.mxu0 0.0
    %231 = vmatpush1.msra.mxu0 0.0
    %232 = vmatprep.subr.mxu0 0.0
    %233 = vmatpush1.msra.mxu0 0.0
    %234 = vmatprep.subr.mxu0 0.0
    %235 = vmatpush1.msra.mxu0 0.0
    %236 = vmatprep.subr.mxu0 0.0
    %237 = vmatpush1.msra.mxu0 0.0
    %238 = vmatprep.subr.mxu0 0.0
    %239 = vmatpush1.msra.mxu0 0.0
    %240 = vmatprep.subr.mxu0 0.0
    %241 = vmatpush1.msra.mxu0 0.0
    %242 = vmatprep.subr.mxu0 0.0
    %243 = vmatpush1.msra.mxu0 0.0
    %244 = vmatprep.subr.mxu0 0.0
    %245 = vmatpush1.msra.mxu0 0.0
    %246 = vmatprep.subr.mxu0 0.0
    %247 = vmatpush1.msra.mxu0 0.0
    %248 = vmatprep.subr.mxu0 0.0
    %249 = vmatpush1.msra.mxu0 0.0
    %250 = vmatprep.subr.mxu0 0.0
    %251 = vmatpush1.msra.mxu0 0.0
    %252 = vmatprep.subr.mxu0 0.0
    %253 = vmatpush1.msra.mxu0 0.0
    %254 = vmatprep.mubr.f32.mxu0 0.0
    %255 = vmatmul.mubr.f32.gmra.mrb[0].mxu0 %v165
    %v256 = vpop.f32.mrb[0].mxu0
    %v257 = vadd.f32 %v188, %v256
    %v258 = vpop.f32.mrb[0].mxu0
    %259 = vmatprep.mubr.f32.mxu0 0.0
    %260 = vmatmul.mubr.f32.gmra.mrb[0].mxu0 %v166
    %v261 = vpop.f32.mrb[0].mxu0
    %v262 = vadd.f32 %v188, %v261
    %v263 = vpop.f32.mrb[0].mxu0
    %264 = vdwg.mxu0
    %265 = vst [vmem:[#allocation8] sm:$0xff] %v257
    %266 = vst [vmem:[#allocation8 + $0x8] sm:$0xff] %v262
    // Predicated region
    $region34: #{tpu_custom_call.1} parent=1 // pred_check
      _
    $region35: #{tpu_custom_call.1} parent=1 // pred_check_branch
      %268 = sbr.rel (0) target = $region37
    $region36: #{tpu_custom_call.1} parent=1 // pred_region
      %s270 = ssub.s32 256, 256
      %271 = vsyncadd [#allocation4], %s270
      %s272 = sshll.u32 [#allocation8], 4
      %s273 = int_to_ptr.vmem [resolvable:$true] %s272
      %278 = dma.vmem_to_hbm [thread:$0]  %s273, 256, %s5, [#allocation4], 128, 128, 8
    $region37: #{tpu_custom_call.1} parent=1 // pred_fallthru
      _
    // Predicated region
    $region38: #{tpu_custom_call.1} parent=1 // pred_check
      _
    $region39: #{tpu_custom_call.1} parent=1 // pred_check_branch
      %280 = sbr.rel (0) target = $region41
    $region40: #{tpu_custom_call.1} parent=1 // pred_region
      %281 = dma.done [#allocation4], 256
    $region41: #{tpu_custom_call.1} parent=1 // pred_fallthru
      _
    %282 = vsyncpa [#allocation3], 1
    %283 = vsyncpa [#allocation6], 1
    %284 = vsyncpa [#allocation4], 1

</llo_original>
